<compile_context>
chip_gen: v7x
topology: tpu7x:2x2x1
jax: 0.10.0
libtpu: 0.0.40
codegen_flags: <defaults>
</compile_context>

<pallas_src>
import functools

import jax
import jax.numpy as jnp
from jax.experimental import pallas as pl
from jax.experimental.pallas import tpu as pltpu


# --------------------------------------------------------------------------
# Kernel 1: stand-in encoder (folded 4x4 pool + 1x1 conv + ReLU) fused with
#           AdaptiveConcatPool2d ([max | avg] over the spatial axis).
#           Batched over Bt images per grid step, bf16 MXU matmul.
# --------------------------------------------------------------------------

def enc_pool_kernel(x_ref, w_ref, b_ref, o_ref, sum_acc, max_acc, *, inv_p):
    # x_ref: (Bt, tP, K) bf16   w_ref: (K, C2) bf16   b_ref: (1, C2) f32
    # o_ref: (Bt, 2*C2) = [max | avg]   scratch sum_acc/max_acc: (Bt, C2) f32
    s = pl.program_id(1)

    @pl.when(s == 0)
    def _init():
        sum_acc[...] = jnp.zeros_like(sum_acc)
        max_acc[...] = jnp.full_like(max_acc, -jnp.inf)

    bt, tp, k = x_ref.shape
    c2 = w_ref.shape[1]

    # One big MXU matmul: M = Bt*tP (sublane-dense), f32 accumulation.
    xm = x_ref[...].reshape(bt * tp, k)
    y = jnp.dot(xm, w_ref[...], preferred_element_type=jnp.float32)     # (Bt*tP, C2)
    y = jnp.maximum(y + b_ref[...], 0.0)                                 # conv bias + ReLU
    y = y.reshape(bt, tp, c2)

    sum_acc[...] += jnp.sum(y, axis=1)                                   # per-image running sum
    max_acc[...] = jnp.maximum(max_acc[...], jnp.max(y, axis=1))         # per-image running max

    @pl.when(s == pl.num_programs(1) - 1)
    def _finalize():
        o_ref[:, 0:c2] = max_acc[...].astype(o_ref.dtype)                # AdaptiveMaxPool2d
        o_ref[:, c2:2 * c2] = (sum_acc[...] * inv_p).astype(o_ref.dtype) # AdaptiveAvgPool2d


def _largest_divisor(total, target, prefer_multiple_of=8):
    """Largest divisor of `total` that is <= target (prefer multiples of 8)."""
    if total <= target:
        return total
    best = None
    for t in range(target, 0, -1):
        if total % t == 0:
            if best is None:
                best = t
            if t % prefer_multiple_of == 0:
                return t
    return best


def enc_pool_pallas(x_patches, w_eff, b_enc, *, batch_tile=32, spatial_tile=512):
    # x_patches: (B, P, K) bf16 channels-last 4x4 patches, B = bs*n, P = w2*h2, K = ch*16
    B, P, K = x_patches.shape
    C2 = w_eff.shape[1]
    Bt = _largest_divisor(B, batch_tile)
    tP = _largest_divisor(P, spatial_tile)
    kernel = functools.partial(enc_pool_kernel, inv_p=1.0 / float(P))
    return pl.pallas_call(
        kernel,
        out_shape=jax.ShapeDtypeStruct((B, 2 * C2), jnp.float32),
        grid=(B // Bt, P // tP),
        in_specs=[
            pl.BlockSpec((Bt, tP, K), lambda b, s: (b, s, 0)),
            pl.BlockSpec((K, C2), lambda b, s: (0, 0)),
            pl.BlockSpec((1, C2), lambda b, s: (0, 0)),
        ],
        out_specs=pl.BlockSpec((Bt, 2 * C2), lambda b, s: (b, 0)),
        scratch_shapes=[pltpu.VMEM((Bt, C2), jnp.float32),   # running sum
                        pltpu.VMEM((Bt, C2), jnp.float32)],  # running max
        compiler_params=pltpu.CompilerParams(
            dimension_semantics=("parallel", "arbitrary")),
    )(x_patches, w_eff, b_enc)


# --------------------------------------------------------------------------
# Kernel 2: 2-layer bidirectional GRU + head (Linear, BN(inference), LeakyReLU, Linear)
#   - input projections hoisted out of the recurrence (one matmul per layer)
#   - fwd/bwd directions fused per step via block-diagonal hidden weights
#   - head batched over all time steps, single output store
# --------------------------------------------------------------------------

def gru_head_kernel(seq_ref, wih_ref, whh_ref, bih_ref, bhh_ref,
                    hw1_ref, hb1_ref, bn_g_ref, bn_b_ref, bn_m_ref, bn_v_ref,
                    hw2_ref, hb2_ref, o_ref, *, n_steps, bs, hidden, bn_eps, leak):
    H = hidden
    H3 = 3 * H

    # seq_ref: (n*bs, 2H), time-major (row = t*bs + b).
    xs = seq_ref[...]

    def cell(gi, gh, h):
        r = jax.nn.sigmoid(gi[:, :H] + gh[:, :H])
        z = jax.nn.sigmoid(gi[:, H:2 * H] + gh[:, H:2 * H])
        g = jnp.tanh(gi[:, 2 * H:] + r * gh[:, 2 * H:])
        return (1.0 - z) * g + z * h

    # NOTE: n_instance is tiny (5), so the recurrence is fully unrolled.  If it ever
    # grows beyond ~8, switch to lax.fori_loop(..., unroll=True) carrying (h_f, h_b).
    for layer in range(2):
        # Hoisted input projection: one (n*bs, 2H) @ (2H, 6H) matmul for BOTH directions
        # and ALL time steps, off the serial chain.
        gi_all = jnp.dot(xs, wih_ref[layer],
                         preferred_element_type=jnp.float32) + bih_ref[layer]  # (n*bs, 6H)

        whh_blk = whh_ref[layer]                      # (2H, 6H) block-diagonal [fwd | bwd]
        bhh = bhh_ref[layer]                          # (1, 6H)

        h_f = jnp.zeros((bs, H), dtype=jnp.float32)
        h_b = jnp.zeros((bs, H), dtype=jnp.float32)
        outs_f = [None] * n_steps
        outs_b = [None] * n_steps
        for s in range(n_steps):
            tf = s                                    # forward direction time index
            tb = n_steps - 1 - s                      # backward direction time index
            hcat = jnp.concatenate([h_f, h_b], axis=-1)                       # (bs, 2H)
            gh = jnp.dot(hcat, whh_blk, preferred_element_type=jnp.float32) + bhh
            gi_f = gi_all[tf * bs:(tf + 1) * bs, 0:H3]
            gi_b = gi_all[tb * bs:(tb + 1) * bs, H3:2 * H3]
            h_f = cell(gi_f, gh[:, 0:H3], h_f)
            h_b = cell(gi_b, gh[:, H3:2 * H3], h_b)
            outs_f[tf] = h_f
            outs_b[tb] = h_b

        xs = jnp.concatenate(
            [jnp.concatenate([outs_f[t], outs_b[t]], axis=-1) for t in range(n_steps)],
            axis=0)                                   # (n*bs, 2H), time-major

    # Head, batched over all n*bs rows:
    # Linear -> BatchNorm1d (inference, running stats) -> Dropout (identity)
    # -> LeakyReLU(0.1) -> Linear.  Single store.
    inv_std = jax.lax.rsqrt(bn_v_ref[...] + bn_eps)
    h1 = jnp.dot(xs, hw1_ref[...], preferred_element_type=jnp.float32) + hb1_ref[...]
    h1 = (h1 - bn_m_ref[...]) * inv_std * bn_g_ref[...] + bn_b_ref[...]
    h1 = jnp.where(h1 >= 0.0, h1, leak * h1)
    out = jnp.dot(h1, hw2_ref[...], preferred_element_type=jnp.float32) + hb2_ref[...]
    o_ref[...] = out.astype(o_ref.dtype)              # (n*bs, 3)


def gru_head_pallas(seq_flat, params, *, n_steps, batch, hidden, bn_eps=1e-5, leak=0.1):
    # seq_flat: (n*bs, 2H) time-major flattened so all kernel slicing is static 2D.
    num_out = params["hw2"].shape[1]
    args = (seq_flat, params["wih_cat"], params["whh_blk"], params["bih_cat"],
            params["bhh_cat"], params["hw1"], params["hb1"], params["bn_g"],
            params["bn_b"], params["bn_m"], params["bn_v"], params["hw2"], params["hb2"])
    kernel = functools.partial(gru_head_kernel, n_steps=n_steps, bs=batch,
                               hidden=hidden, bn_eps=bn_eps, leak=leak)

    def full_spec(a):
        return pl.BlockSpec(a.shape, lambda i, _nd=a.ndim: (0,) * _nd)

    return pl.pallas_call(
        kernel,
        out_shape=jax.ShapeDtypeStruct((n_steps * batch, num_out), jnp.float32),
        grid=(1,),
        in_specs=[full_spec(a) for a in args],
        out_specs=pl.BlockSpec((n_steps * batch, num_out), lambda i: (0, 0)),
    )(*args)


# --------------------------------------------------------------------------
# Parameter preparation (done once, outside the per-call forward)
# --------------------------------------------------------------------------

def prepare_params(p):
    """Fold the 4x4 pool into the conv weight (bf16), build concatenated / block-diagonal
    GRU weights so both directions run in one matmul per step."""
    H = p["whh"].shape[1]
    out = dict(p)

    # Encoder: fold 4x4 avg-pool into the 1x1-conv weight; cast to bf16 for the MXU.
    out["w_eff"] = (jnp.repeat(p["w_conv"], 16, axis=0) * (1.0 / 16.0)).astype(jnp.bfloat16)

    def cat2(a, l):                                   # concat fwd/bwd along gate axis
        return jnp.concatenate([a[2 * l], a[2 * l + 1]], axis=-1)

    out["wih_cat"] = jnp.stack([cat2(p["wih"], l) for l in range(2)])   # (2, 2H, 6H)
    out["bih_cat"] = jnp.stack([cat2(p["bih"], l) for l in range(2)])   # (2, 1, 6H)
    out["bhh_cat"] = jnp.stack([cat2(p["bhh"], l) for l in range(2)])   # (2, 1, 6H)

    Z = jnp.zeros((H, 3 * H), jnp.float32)

    def blk(l):                                       # block-diag [whh_fwd, 0; 0, whh_bwd]
        return jnp.concatenate([
            jnp.concatenate([p["whh"][2 * l], Z], axis=1),
            jnp.concatenate([Z, p["whh"][2 * l + 1]], axis=1)], axis=0)

    out["whh_blk"] = jnp.stack([blk(l) for l in range(2)])              # (2, 2H, 6H)
    return out


# --------------------------------------------------------------------------
# Full forward + pure-JAX reference
# --------------------------------------------------------------------------

def rsna_gru2_forward(x, params):
    """x: (bs, n, ch, w, h) float32, PyTorch layout.  `params` must be prepare_params()'d."""
    bs, n, ch, w, h = x.shape
    assert w % 4 == 0 and h % 4 == 0, "stand-in encoder needs spatial dims % 4 == 0"
    B = bs * n
    w2, h2 = w // 4, h // 4
    H = params["whh_blk"].shape[1] // 2

    # ---- stand-in encoder + AdaptiveConcatPool2d (single fused Pallas kernel) ----
    # channels-last 4x4 patches (bf16); the 4x4 avg-pool is folded into the conv weight.
    xp = x.reshape(B, ch, w2, 4, h2, 4)
    xp = jnp.transpose(xp, (0, 2, 4, 1, 3, 5)).reshape(B, w2 * h2, ch * 16)
    xp = xp.astype(jnp.bfloat16)
    pooled = enc_pool_pallas(xp, params["w_eff"], params["b_enc"])       # (B, 2*nc) f32

    # ---- GRU (2 layers, bidirectional) + head (single fused Pallas kernel) ----
    seq = pooled.reshape(bs, n, 2 * H)
    seq_flat = jnp.transpose(seq, (1, 0, 2)).reshape(n * bs, 2 * H)      # time-major rows
    out = gru_head_pallas(seq_flat, params, n_steps=n, batch=bs, hidden=H)  # (n*bs, 3)
    out = out.reshape(n, bs, -1)
    return jnp.transpose(out, (1, 0, 2)).reshape(bs, -1)                 # (bs, n*3)


def rsna_gru2_forward_ref(x, params):
    """Pure-JAX f32 reference with identical math (for correctness checking)."""
    bs, n, ch, w, h = x.shape
    B = bs * n
    w2, h2 = w // 4, h // 4
    H = params["whh"].shape[1]

    xd = x.reshape(B, ch, w2, 4, h2, 4).mean(axis=(3, 5))                # (B, ch, w2, h2)
    xd = jnp.transpose(xd, (0, 2, 3, 1))                                 # (B, w2, h2, ch)
    feats = jnp.maximum(
        jnp.einsum("bijc,cd->bijd", xd, params["w_conv"]) + params["b_enc"], 0.0)
    pooled = jnp.concatenate([feats.max(axis=(1, 2)), feats.mean(axis=(1, 2))], axis=-1)
    xs = pooled.reshape(bs, n, 2 * H)

    for layer in range(2):
        outs = []
        for d in range(2):
            ld = 2 * layer + d
            wih, whh = params["wih"][ld], params["whh"][ld]
            bih, bhh = params["bih"][ld], params["bhh"][ld]
            hcur = jnp.zeros((bs, H), jnp.float32)
            hs = [None] * n
            order = range(n) if d == 0 else range(n - 1, -1, -1)
            for t in order:
                gi = xs[:, t, :] @ wih + bih
                gh = hcur @ whh + bhh
                r = jax.nn.sigmoid(gi[:, :H] + gh[:, :H])
                z = jax.nn.sigmoid(gi[:, H:2 * H] + gh[:, H:2 * H])
                g = jnp.tanh(gi[:, 2 * H:] + r * gh[:, 2 * H:])
                hcur = (1.0 - z) * g + z * hcur
                hs[t] = hcur
            outs.append(hs)
        xs = jnp.stack([jnp.concatenate([outs[0][t], outs[1][t]], -1)
                        for t in range(n)], axis=1)

    feat = xs.reshape(bs * n, 2 * H)
    h1 = feat @ params["hw1"] + params["hb1"]
    h1 = (h1 - params["bn_m"]) * jax.lax.rsqrt(params["bn_v"] + 1e-5) \
         * params["bn_g"] + params["bn_b"]
    h1 = jnp.where(h1 >= 0.0, h1, 0.1 * h1)
    out = h1 @ params["hw2"] + params["hb2"]
    return out.reshape(bs, -1)


# --------------------------------------------------------------------------
# main
# --------------------------------------------------------------------------

if __name__ == "__main__":
    bs, n, ch, w, h = 2, 5, 3, 16, 16   # n = n_instance (module default 5)
    nc = 128                            # stand-in encoder channels ("nc"; real model: 2048)
    H = nc                              # GRU hidden size
    num_out = 3                         # head's final Linear outputs 3 per instance

    key = jax.random.PRNGKey(0)
    ks = jax.random.split(key, 14)
    x = jax.random.normal(ks[0], (bs, n, ch, w, h), dtype=jnp.float32)

    raw_params = {
        # stand-in encoder (1x1 conv after folded 4x4 avg-pool)
        "w_conv": 0.2 * jax.random.normal(ks[1], (ch, nc), dtype=jnp.float32),
        "b_enc": 0.05 * jax.random.normal(ks[2], (1, nc), dtype=jnp.float32),
        # GRU weights, stacked as index = 2*layer + direction (dir 0 fwd, 1 bwd)
        "wih": 0.1 * jax.random.normal(ks[3], (4, 2 * H, 3 * H), dtype=jnp.float32),
        "whh": 0.1 * jax.random.normal(ks[4], (4, H, 3 * H), dtype=jnp.float32),
        "bih": 0.05 * jax.random.normal(ks[5], (4, 1, 3 * H), dtype=jnp.float32),
        "bhh": 0.05 * jax.random.normal(ks[6], (4, 1, 3 * H), dtype=jnp.float32),
        # head
        "hw1": 0.1 * jax.random.normal(ks[7], (2 * H, H // 2), dtype=jnp.float32),
        "hb1": 0.05 * jnp.ones((1, H // 2), dtype=jnp.float32),
        "bn_g": 1.0 + 0.1 * jax.random.normal(ks[8], (1, H // 2), dtype=jnp.float32),
        "bn_b": 0.05 * jax.random.normal(ks[9], (1, H // 2), dtype=jnp.float32),
        "bn_m": 0.05 * jax.random.normal(ks[10], (1, H // 2), dtype=jnp.float32),
        "bn_v": 1.0 + 0.5 * jnp.abs(jax.random.normal(ks[11], (1, H // 2), dtype=jnp.float32)),
        "hw2": 0.1 * jax.random.normal(ks[12], (H // 2, num_out), dtype=jnp.float32),
        "hb2": 0.05 * jnp.ones((1, num_out), dtype=jnp.float32),
    }

    params = prepare_params(raw_params)                 # done once, not per forward call

    out = jax.block_until_ready(rsna_gru2_forward(x, params))
    ref = rsna_gru2_forward_ref(x, raw_params)

    assert out.shape == (bs, n * num_out), out.shape
    # Tolerance loosened vs. the pure-f32 version because the encoder matmul runs in
    # bfloat16 (f32 accumulation); observed error is ~1e-3.
    assert jnp.allclose(out, ref, atol=2e-2, rtol=2e-2), (out, ref)

    print("KERNEL_OK")
</pallas_src>

<mosaic_0001>
module attributes {stable_mosaic.version = 11 : i64} {
  func.func @enc_pool_kernel(%arg0: i32, %arg1: i32, %arg2: memref<10x16x48xbf16, #tpu.memory_space<vmem>>, %arg3: memref<48x128xbf16, #tpu.memory_space<vmem>>, %arg4: memref<1x128xf32, #tpu.memory_space<vmem>>, %arg5: memref<10x256xf32, #tpu.memory_space<vmem>>, %arg6: memref<10x128xf32, #tpu.memory_space<vmem>>, %arg7: memref<10x128xf32, #tpu.memory_space<vmem>>) attributes {dimension_semantics = [#tpu.dimension_semantics<parallel>, #tpu.dimension_semantics<arbitrary>], iteration_bounds = array<i64: 1, 1>, scalar_prefetch = 0 : i64, scratch_operands = 2 : i64, tpu.core_type = #tpu.core_type<tc>, window_params = [{transform_indices = @transform_0, window_bounds = array<i64: 10, 16, 48>}, {pipeline_mode = #tpu.pipeline_mode<synchronous>, transform_indices = @transform_1, window_bounds = array<i64: 48, 128>}, {pipeline_mode = #tpu.pipeline_mode<synchronous>, transform_indices = @transform_2, window_bounds = array<i64: 1, 128>}, {transform_indices = @transform_3, window_bounds = array<i64: 10, 256>}]} {
    %c0_i32 = arith.constant 0 : i32
    %0 = arith.cmpi eq, %arg1, %c0_i32 : i32
    %1 = arith.extui %0 : i1 to i32
    %c0_i32_0 = arith.constant 0 : i32
    %2 = arith.cmpi ne, %1, %c0_i32_0 : i32
    scf.if %2 {
      %cst_20 = arith.constant 0.000000e+00 : f32
      %24 = vector.broadcast %cst_20 : f32 to vector<10x128xf32>
      %c0_21 = arith.constant 0 : index
      %c0_22 = arith.constant 0 : index
      %25 = vector.load %arg6[%c0_21, %c0_22] : memref<10x128xf32, #tpu.memory_space<vmem>>, vector<10x128xf32>
      tpu.vector_store %arg6[%c0_21, %c0_22], %24 {strides = array<i32>} : memref<10x128xf32, #tpu.memory_space<vmem>>, vector<10x128xf32>,
      %cst_23 = arith.constant 0xFF800000 : f32
      %26 = vector.broadcast %cst_23 : f32 to vector<10x128xf32>
      %c0_24 = arith.constant 0 : index
      %c0_25 = arith.constant 0 : index
      %27 = vector.load %arg7[%c0_24, %c0_25] : memref<10x128xf32, #tpu.memory_space<vmem>>, vector<10x128xf32>
      tpu.vector_store %arg7[%c0_24, %c0_25], %26 {strides = array<i32>} : memref<10x128xf32, #tpu.memory_space<vmem>>, vector<10x128xf32>,
    } else {
    }
    %c0 = arith.constant 0 : index
    %c0_1 = arith.constant 0 : index
    %c0_2 = arith.constant 0 : index
    %3 = vector.load %arg2[%c0, %c0_1, %c0_2] : memref<10x16x48xbf16, #tpu.memory_space<vmem>>, vector<10x16x48xbf16>
    %4 = vector.shape_cast %3 : vector<10x16x48xbf16> to vector<160x48xbf16>
    %c0_3 = arith.constant 0 : index
    %c0_4 = arith.constant 0 : index
    %5 = vector.load %arg3[%c0_3, %c0_4] : memref<48x128xbf16, #tpu.memory_space<vmem>>, vector<48x128xbf16>
    %cst = arith.constant dense<0.000000e+00> : vector<160x128xf32>
    %6 = tpu.matmul %4, %5, %cst {dimension_numbers = #tpu.dot_dimension_numbers<[1], [0], [0], [1], [0, 0, 1, 1], [], []>} : vector<160x48xbf16>, vector<48x128xbf16>, vector<160x128xf32> -> vector<160x128xf32>
    %c0_5 = arith.constant 0 : index
    %c0_6 = arith.constant 0 : index
    %7 = vector.load %arg4[%c0_5, %c0_6] : memref<1x128xf32, #tpu.memory_space<vmem>>, vector<1x128xf32>
    %8 = vector.broadcast %7 : vector<1x128xf32> to vector<160x128xf32>
    %9 = arith.addf %6, %8 : vector<160x128xf32>
    %cst_7 = arith.constant 0.000000e+00 : f32
    %10 = vector.broadcast %cst_7 : f32 to vector<160x128xf32>
    %11 = arith.maximumf %9, %10 : vector<160x128xf32>
    %12 = vector.shape_cast %11 : vector<160x128xf32> to vector<10x16x128xf32>
    %c0_8 = arith.constant 0 : index
    %c0_9 = arith.constant 0 : index
    %13 = vector.load %arg6[%c0_8, %c0_9] : memref<10x128xf32, #tpu.memory_space<vmem>>, vector<10x128xf32>
    %cst_10 = arith.constant dense<0.000000e+00> : vector<10x128xf32>
    %14 = vector.multi_reduction <add>, %12, %cst_10 [1] : vector<10x16x128xf32> to vector<10x128xf32>
    %15 = arith.addf %13, %14 : vector<10x128xf32>
    %c0_11 = arith.constant 0 : index
    %c0_12 = arith.constant 0 : index
    %16 = vector.load %arg6[%c0_11, %c0_12] : memref<10x128xf32, #tpu.memory_space<vmem>>, vector<10x128xf32>
    tpu.vector_store %arg6[%c0_11, %c0_12], %15 {strides = array<i32>} : memref<10x128xf32, #tpu.memory_space<vmem>>, vector<10x128xf32>,
    %c0_13 = arith.constant 0 : index
    %c0_14 = arith.constant 0 : index
    %17 = vector.load %arg7[%c0_13, %c0_14] : memref<10x128xf32, #tpu.memory_space<vmem>>, vector<10x128xf32>
    %cst_15 = arith.constant dense<0xFF800000> : vector<10x128xf32>
    %18 = vector.multi_reduction <maximumf>, %12, %cst_15 [1] : vector<10x16x128xf32> to vector<10x128xf32>
    %19 = arith.maximumf %17, %18 : vector<10x128xf32>
    %c0_16 = arith.constant 0 : index
    %c0_17 = arith.constant 0 : index
    %20 = vector.load %arg7[%c0_16, %c0_17] : memref<10x128xf32, #tpu.memory_space<vmem>>, vector<10x128xf32>
    tpu.vector_store %arg7[%c0_16, %c0_17], %19 {strides = array<i32>} : memref<10x128xf32, #tpu.memory_space<vmem>>, vector<10x128xf32>,
    %c0_i32_18 = arith.constant 0 : i32
    %21 = arith.cmpi eq, %arg1, %c0_i32_18 : i32
    %22 = arith.extui %21 : i1 to i32
    %c0_i32_19 = arith.constant 0 : i32
    %23 = arith.cmpi ne, %22, %c0_i32_19 : i32
    scf.if %23 {
      %c0_20 = arith.constant 0 : index
      %c0_21 = arith.constant 0 : index
      %24 = vector.load %arg7[%c0_20, %c0_21] : memref<10x128xf32, #tpu.memory_space<vmem>>, vector<10x128xf32>
      %c0_22 = arith.constant 0 : index
      %c0_23 = arith.constant 0 : index
      %25 = vector.load %arg5[%c0_22, %c0_23] : memref<10x256xf32, #tpu.memory_space<vmem>>, vector<10x128xf32>
      tpu.vector_store %arg5[%c0_22, %c0_23], %24 {strides = array<i32>} : memref<10x256xf32, #tpu.memory_space<vmem>>, vector<10x128xf32>,
      %c0_24 = arith.constant 0 : index
      %c0_25 = arith.constant 0 : index
      %26 = vector.load %arg6[%c0_24, %c0_25] : memref<10x128xf32, #tpu.memory_space<vmem>>, vector<10x128xf32>
      %cst_26 = arith.constant 6.250000e-02 : f32
      %27 = vector.broadcast %cst_26 : f32 to vector<10x128xf32>
      %28 = arith.mulf %26, %27 : vector<10x128xf32>
      %c0_27 = arith.constant 0 : index
      %c128 = arith.constant 128 : index
      %29 = vector.load %arg5[%c0_27, %c128] : memref<10x256xf32, #tpu.memory_space<vmem>>, vector<10x128xf32>
      tpu.vector_store %arg5[%c0_27, %c128], %28 {strides = array<i32>} : memref<10x256xf32, #tpu.memory_space<vmem>>, vector<10x128xf32>,
    } else {
    }
    return
  }
  func.func @transform_0(%arg0: i32, %arg1: i32) -> (i32, i32, i32) {
    %c0_i32 = arith.constant 0 : i32
    %c0_i32_0 = arith.constant 0 : i32
    return %arg0, %arg1, %c0_i32 : i32, i32, i32
  }
  func.func @transform_1(%arg0: i32, %arg1: i32) -> (i32, i32) {
    %c0_i32 = arith.constant 0 : i32
    %c0_i32_0 = arith.constant 0 : i32
    %c0_i32_1 = arith.constant 0 : i32
    return %c0_i32, %c0_i32_0 : i32, i32
  }
  func.func @transform_2(%arg0: i32, %arg1: i32) -> (i32, i32) {
    %c0_i32 = arith.constant 0 : i32
    %c0_i32_0 = arith.constant 0 : i32
    %c0_i32_1 = arith.constant 0 : i32
    return %c0_i32, %c0_i32_0 : i32, i32
  }
  func.func @transform_3(%arg0: i32, %arg1: i32) -> (i32, i32) {
    %c0_i32 = arith.constant 0 : i32
    %c0_i32_0 = arith.constant 0 : i32
    return %arg0, %c0_i32 : i32, i32
  }
}

</mosaic_0001>

<llo_original>
// kernel: tpu_custom_call.1
$region0: #{tpu_custom_call.1}
  #allocation0 [shape = 'u32[]', space=smem, size = 0x4, offset = 0x4, fixed_abs, tag = 'smem constant byte address 0x4 - core index']
  #allocation1 [shape = 'u32[144,128]{1,0:T(1,128)}', space=vmem, size = 0x12000, scoped, tag = 'internal scratch']
  #allocation2 [shape = 'f32[10,128]{1,0:T(8,128)}', space=vmem, size = 0x2000, scoped, tag = 'scratch operand']
  #allocation3 [shape = 'f32[10,128]{1,0:T(8,128)}', space=vmem, size = 0x2000, scoped, tag = 'scratch operand']
  %s0 = inlined_call_operand.hbm [shape: bf16[10,16,48], index: 0, kind: input, shape index: {}]
  %s1 = inlined_call_operand.hbm [shape: bf16[48,128], index: 1, kind: input, shape index: {}]
  %s2 = inlined_call_operand.vmem [shape: f32[1,128], index: 2, kind: input, shape index: {}]
  %s3 = inlined_call_operand.hbm [shape: f32[10,256], index: 3, kind: output, shape index: {}]
  %s4 = sld [smem:[#allocation0]]
  $region38: #{tpu_custom_call.1} parent=0
    _
  %s6 = ssub.s32 1, %s4
  %s7 = scalar_select 0, %s6, %s4
  $region1: #{tpu_custom_call.1} parent=0
    #allocation4 [shape = 'u8[40960]{0}', space=vmem, size = 0xa000, scoped, tag = 'input window, operand 0, single buffered']
    #allocation5 [shape = 's32[1]{0}', space=sflag, size = 0x4, scoped, tag = 'scoped memory for tpu_custom_call.1']
    #allocation6 [shape = 's32[1]{0}', space=sflag, size = 0x4, scoped, tag = 'scoped memory for tpu_custom_call.1']
    #allocation7 [shape = 'u8[12288]{0}', space=vmem, size = 0x3000, scoped, tag = 'input window, operand 1, single buffered']
    #allocation8 [shape = 's32[1]{0}', space=sflag, size = 0x4, scoped, tag = 'scoped memory for tpu_custom_call.1']
    #allocation9 [shape = 'u8[16384]{0}', space=vmem, size = 0x4000, scoped, tag = 'output window, operand 0, single buffered']
    %8 = vsyncpa [#allocation5], 0
    %9 = vsyncpa [#allocation8], 0
    %10 = vsyncpa [#allocation6], 0
    // Predicated region
    $region2: #{tpu_custom_call.1} parent=1 // pred_check
      _
    $region3: #{tpu_custom_call.1} parent=1 // pred_check_branch
      %12 = sbr.rel (0) target = $region5
    $region4: #{tpu_custom_call.1} parent=1 // pred_region
      %s14 = ssub.s32 1280, 1280
      %15 = vsyncadd [#allocation5], %s14
      %s16 = sshll.u32 [#allocation4], 4
      %s17 = int_to_ptr.vmem [resolvable:$true] %s16
      %22 = dma.hbm_to_vmem [thread:$0]  %s0, 1280, %s17, [#allocation5], 64, 64, 4
    $region5: #{tpu_custom_call.1} parent=1 // pred_fallthru
      _
    // Predicated region
    $region6: #{tpu_custom_call.1} parent=1 // pred_check
      _
    $region7: #{tpu_custom_call.1} parent=1 // pred_check_branch
      %24 = sbr.rel (0) target = $region9
    $region8: #{tpu_custom_call.1} parent=1 // pred_region
      %s26 = ssub.s32 384, 384
      %27 = vsyncadd [#allocation8], %s26
      %s28 = sshll.u32 [#allocation7], 4
      %s29 = int_to_ptr.vmem [resolvable:$true] %s28
      %34 = dma.hbm_to_vmem [thread:$0]  %s1, 384, %s29, [#allocation8], 64, 64, 4
    $region9: #{tpu_custom_call.1} parent=1 // pred_fallthru
      _
    // Predicated region
    $region10: #{tpu_custom_call.1} parent=1 // pred_check
      _
    $region11: #{tpu_custom_call.1} parent=1 // pred_check_branch
      %36 = sbr.rel (0) target = $region13
    $region12: #{tpu_custom_call.1} parent=1 // pred_region
      _
    $region13: #{tpu_custom_call.1} parent=1 // pred_fallthru
      _
    // Predicated region
    $region14: #{tpu_custom_call.1} parent=1 // pred_check
      _
    $region15: #{tpu_custom_call.1} parent=1 // pred_check_branch
      %38 = sbr.rel (0) target = $region17
    $region16: #{tpu_custom_call.1} parent=1 // pred_region
      %39 = dma.done [#allocation5], 1280
    $region17: #{tpu_custom_call.1} parent=1 // pred_fallthru
      _
    // Predicated region
    $region18: #{tpu_custom_call.1} parent=1 // pred_check
      _
    $region19: #{tpu_custom_call.1} parent=1 // pred_check_branch
      %41 = sbr.rel (0) target = $region21
    $region20: #{tpu_custom_call.1} parent=1 // pred_region
      %42 = dma.done [#allocation8], 384
    $region21: #{tpu_custom_call.1} parent=1 // pred_fallthru
      _
    %p44 = scmp.eq.s32.totalorder 0, 0
    // Predicated region
    $region22: #{tpu_custom_call.1} parent=1 // pred_check
      %p45 = pneg %p44
    $region23: #{tpu_custom_call.1} parent=1 // pred_check_branch
      %47 = sbr.rel (%p45) target = $region25
    $region24: #{tpu_custom_call.1} parent=1 // pred_region
      %48 = vst [vmem:[#allocation2] sm:$0xff] 0.0
      %49 = vst [vmem:[#allocation2 + $0x8] sm:$0x3] 0.0
      %50 = vst [vmem:[#allocation3] sm:$0xff] -inf
      %51 = vst [vmem:[#allocation3 + $0x8] sm:$0x3] -inf
    $region25: #{tpu_custom_call.1} parent=1 // pred_fallthru
      _
    %v52 = vld [vmem:[#allocation4] sm:$0xf]
    %v53 = vld [vmem:[#allocation4 + $0x4] sm:$0xf]
    %v54 = vld [vmem:[#allocation4 + $0x8] sm:$0xf]
    %v55 = vld [vmem:[#allocation4 + $0xc] sm:$0xf]
    %v56 = vld [vmem:[#allocation4 + $0x10] sm:$0xf]
    %v57 = vld [vmem:[#allocation4 + $0x14] sm:$0xf]
    %v58 = vld [vmem:[#allocation4 + $0x18] sm:$0xf]
    %v59 = vld [vmem:[#allocation4 + $0x1c] sm:$0xf]
    %v60 = vld [vmem:[#allocation4 + $0x20] sm:$0xf]
    %v61 = vld [vmem:[#allocation4 + $0x24] sm:$0xf]
    %v62 = vld [vmem:[#allocation4 + $0x28] sm:$0xf]
    %v63 = vld [vmem:[#allocation4 + $0x2c] sm:$0xf]
    %v64 = vld [vmem:[#allocation4 + $0x30] sm:$0xf]
    %v65 = vld [vmem:[#allocation4 + $0x34] sm:$0xf]
    %v66 = vld [vmem:[#allocation4 + $0x38] sm:$0xf]
    %v67 = vld [vmem:[#allocation4 + $0x3c] sm:$0xf]
    %v68 = vld [vmem:[#allocation4 + $0x40] sm:$0xf]
    %v69 = vld [vmem:[#allocation4 + $0x44] sm:$0xf]
    %v70 = vld [vmem:[#allocation4 + $0x48] sm:$0xf]
    %v71 = vld [vmem:[#allocation4 + $0x4c] sm:$0xf]
    %v72 = vld [vmem:[#allocation7] sm:$0xf]
    %v73 = vld [vmem:[#allocation7 + $0x4] sm:$0xf]
    %v74 = vld [vmem:[#allocation7 + $0x8] sm:$0xf]
    %v75 = vld [vmem:[#allocation7 + $0xc] sm:$0xf]
    %v76 = vld [vmem:[#allocation7 + $0x10] sm:$0xf]
    %v77 = vld [vmem:[#allocation7 + $0x14] sm:$0xf]
    %v78 = vld [vmem:[%s2] sm:$0x1]
    %v80 = vlaneseq
    %v81 = vshrl.u32 %v80, 7
    %v82 = vsub.s32 0, %v81
    %v83 = vrot.slane %v78, %v82
    %v105 = vunpack.c.l.b16 %v52
    %v106 = vunpack.c.l.b16 %v53
    %v107 = vunpack.c.l.b16 %v54
    %v108 = vunpack.c.l.b16 %v55
    %v109 = vunpack.c.l.b16 %v56
    %v110 = vunpack.c.l.b16 %v57
    %v111 = vunpack.c.l.b16 %v58
    %v112 = vunpack.c.l.b16 %v59
    %v113 = vunpack.c.l.b16 %v60
    %v114 = vunpack.c.l.b16 %v61
    %v115 = vunpack.c.l.b16 %v62
    %v116 = vunpack.c.l.b16 %v63
    %v117 = vunpack.c.l.b16 %v64
    %v118 = vunpack.c.l.b16 %v65
    %v119 = vunpack.c.l.b16 %v66
    %v120 = vunpack.c.l.b16 %v67
    %v121 = vunpack.c.l.b16 %v68
    %v122 = vunpack.c.l.b16 %v69
    %v123 = vunpack.c.l.b16 %v70
    %v124 = vunpack.c.l.b16 %v71
    %v125 = vpack.c.b16 %v106, %v105
    %v126 = vpack.c.b16 %v108, %v107
    %v127 = vpack.c.b16 %v110, %v109
    %v128 = vpack.c.b16 %v112, %v111
    %v129 = vpack.c.b16 %v114, %v113
    %v130 = vpack.c.b16 %v116, %v115
    %v131 = vpack.c.b16 %v118, %v117
    %v132 = vpack.c.b16 %v120, %v119
    %v133 = vpack.c.b16 %v122, %v121
    %v134 = vpack.c.b16 %v124, %v123
    %v141 = vunpack.c.l.b16 %v72
    %v142 = vunpack.c.l.b16 %v73
    %v143 = vunpack.c.l.b16 %v74
    %v144 = vunpack.c.l.b16 %v75
    %v145 = vunpack.c.l.b16 %v76
    %v146 = vunpack.c.l.b16 %v77
    %v147 = vpack.c.b16 %v142, %v141
    %v148 = vpack.c.b16 %v144, %v143
    %v149 = vpack.c.b16 %v146, %v145
    %vm153 = vcmask 392192
    %v155 = vsel %vm153, %v125, 0
    %v158 = vsel %vm153, %v126, 0
    %v161 = vsel %vm153, %v127, 0
    %v164 = vsel %vm153, %v128, 0
    %v167 = vsel %vm153, %v129, 0
    %v170 = vsel %vm153, %v130, 0
    %v173 = vsel %vm153, %v131, 0
    %v176 = vsel %vm153, %v132, 0
    %v179 = vsel %vm153, %v133, 0
    %v182 = vsel %vm153, %v134, 0
    %184 = vmatprep.subr.bf16.mxu0 0
    %185 = vmatpush1.bf16.msra.mxu0 %v147
    %186 = vmatprep.subr.bf16.mxu0 0
    %187 = vmatpush1.bf16.msra.mxu0 %v148
    %188 = vmatprep.subr.bf16.mxu0 0
    %189 = vmatpush1.bf16.msra.mxu0 %v149
    %190 = vmatprep.subr.bf16.mxu0 0
    %191 = vmatpush1.bf16.msra.mxu0 0
    %192 = vmatprep.subr.bf16.mxu0 0
    %193 = vmatpush1.bf16.msra.mxu0 0
    %194 = vmatprep.subr.bf16.mxu0 0
    %195 = vmatpush1.bf16.msra.mxu0 0
    %196 = vmatprep.subr.bf16.mxu0 0
    %197 = vmatpush1.bf16.msra.mxu0 0
    %198 = vmatprep.subr.bf16.mxu0 0
    %199 = vmatpush1.bf16.msra.mxu0 0
    %200 = vmatprep.subr.bf16.mxu0 0
    %201 = vmatpush1.bf16.msra.mxu0 0
    %202 = vmatprep.subr.bf16.mxu0 0
    %203 = vmatpush1.bf16.msra.mxu0 0
    %204 = vmatprep.subr.bf16.mxu0 0
    %205 = vmatpush1.bf16.msra.mxu0 0
    %206 = vmatprep.subr.bf16.mxu0 0
    %207 = vmatpush1.bf16.msra.mxu0 0
    %208 = vmatprep.subr.bf16.mxu0 0
    %209 = vmatpush1.bf16.msra.mxu0 0
    %210 = vmatprep.subr.bf16.mxu0 0
    %211 = vmatpush1.bf16.msra.mxu0 0
    %212 = vmatprep.subr.bf16.mxu0 0
    %213 = vmatpush1.bf16.msra.mxu0 0
    %214 = vmatprep.subr.bf16.mxu0 0
    %215 = vmatpush1.bf16.msra.mxu0 0
    %216 = vmatprep.mubr.bf16.mxu0 0
    %217 = vmatmul.mubr.bf16.gmra.mrb[0].mxu0 %v155
    %v218 = vpop.f32.mrb[0].mxu0
    %v219 = vadd.f32 %v83, %v218
    %v220 = vpop.f32.mrb[0].mxu0
    %v221 = vpop.f32.mrb[0].mxu0
    %v222 = vadd.f32 %v83, %v221
    %v223 = vpop.f32.mrb[0].mxu0
    %224 = vmatprep.mubr.bf16.mxu0 0
    %225 = vmatmul.mubr.bf16.gmra.mrb[0].mxu0 %v158
    %v226 = vpop.f32.mrb[0].mxu0
    %v227 = vadd.f32 %v83, %v226
    %v228 = vpop.f32.mrb[0].mxu0
    %v229 = vpop.f32.mrb[0].mxu0
    %v230 = vadd.f32 %v83, %v229
    %v231 = vpop.f32.mrb[0].mxu0
    %232 = vmatprep.mubr.bf16.mxu0 0
    %233 = vmatmul.mubr.bf16.gmra.mrb[0].mxu0 %v161
    %v234 = vpop.f32.mrb[0].mxu0
    %v235 = vadd.f32 %v83, %v234
    %v236 = vpop.f32.mrb[0].mxu0
    %v237 = vpop.f32.mrb[0].mxu0
    %v238 = vadd.f32 %v83, %v237
    %v239 = vpop.f32.mrb[0].mxu0
    %240 = vmatprep.mubr.bf16.mxu0 0
    %241 = vmatmul.mubr.bf16.gmra.mrb[0].mxu0 %v164
    %v242 = vpop.f32.mrb[0].mxu0
    %v243 = vadd.f32 %v83, %v242
    %v244 = vpop.f32.mrb[0].mxu0
    %v245 = vpop.f32.mrb[0].mxu0
    %v246 = vadd.f32 %v83, %v245
    %v247 = vpop.f32.mrb[0].mxu0
    %248 = vmatprep.mubr.bf16.mxu0 0
    %249 = vmatmul.mubr.bf16.gmra.mrb[0].mxu0 %v167
    %v250 = vpop.f32.mrb[0].mxu0
    %v251 = vadd.f32 %v83, %v250
    %v252 = vpop.f32.mrb[0].mxu0
    %v253 = vpop.f32.mrb[0].mxu0
    %v254 = vadd.f32 %v83, %v253
    %v255 = vpop.f32.mrb[0].mxu0
    %256 = vmatprep.mubr.bf16.mxu0 0
    %257 = vmatmul.mubr.bf16.gmra.mrb[0].mxu0 %v170
    %v258 = vpop.f32.mrb[0].mxu0
    %v259 = vadd.f32 %v83, %v258
    %v260 = vpop.f32.mrb[0].mxu0
    %v261 = vpop.f32.mrb[0].mxu0
    %v262 = vadd.f32 %v83, %v261
    %v263 = vpop.f32.mrb[0].mxu0
    %264 = vmatprep.mubr.bf16.mxu0 0
    %265 = vmatmul.mubr.bf16.gmra.mrb[0].mxu0 %v173
    %v266 = vpop.f32.mrb[0].mxu0
    %v267 = vadd.f32 %v83, %v266
    %v268 = vpop.f32.mrb[0].mxu0
    %v269 = vpop.f32.mrb[0].mxu0
    %v270 = vadd.f32 %v83, %v269
    %v271 = vpop.f32.mrb[0].mxu0
    %272 = vmatprep.mubr.bf16.mxu0 0
    %273 = vmatmul.mubr.bf16.gmra.mrb[0].mxu0 %v176
    %v274 = vpop.f32.mrb[0].mxu0
    %v275 = vadd.f32 %v83, %v274
    %v276 = vpop.f32.mrb[0].mxu0
    %v277 = vpop.f32.mrb[0].mxu0
    %v278 = vadd.f32 %v83, %v277
    %v279 = vpop.f32.mrb[0].mxu0
    %280 = vmatprep.mubr.bf16.mxu0 0
    %281 = vmatmul.mubr.bf16.gmra.mrb[0].mxu0 %v179
    %v282 = vpop.f32.mrb[0].mxu0
    %v283 = vadd.f32 %v83, %v282
    %v284 = vpop.f32.mrb[0].mxu0
    %v285 = vpop.f32.mrb[0].mxu0
    %v286 = vadd.f32 %v83, %v285
    %v287 = vpop.f32.mrb[0].mxu0
    %288 = vmatprep.mubr.bf16.mxu0 0
    %289 = vmatmul.mubr.bf16.gmra.mrb[0].mxu0 %v182
    %v290 = vpop.f32.mrb[0].mxu0
    %v291 = vadd.f32 %v83, %v290
    %v292 = vpop.f32.mrb[0].mxu0
    %v293 = vpop.f32.mrb[0].mxu0
    %v294 = vadd.f32 %v83, %v293
    %v295 = vpop.f32.mrb[0].mxu0
    %296 = vdwg.mxu0
    %v297 = vmax.f32 %v219, 0.0
    %v298 = vmax.f32 %v222, 0.0
    %v299 = vmax.f32 %v227, 0.0
    %v300 = vmax.f32 %v230, 0.0
    %v301 = vmax.f32 %v235, 0.0
    %v302 = vmax.f32 %v238, 0.0
    %v303 = vmax.f32 %v243, 0.0
    %v304 = vmax.f32 %v246, 0.0
    %v305 = vmax.f32 %v251, 0.0
    %v306 = vmax.f32 %v254, 0.0
    %v307 = vmax.f32 %v259, 0.0
    %v308 = vmax.f32 %v262, 0.0
    %v309 = vmax.f32 %v267, 0.0
    %v310 = vmax.f32 %v270, 0.0
    %v311 = vmax.f32 %v275, 0.0
    %v312 = vmax.f32 %v278, 0.0
    %v313 = vmax.f32 %v283, 0.0
    %v314 = vmax.f32 %v286, 0.0
    %v315 = vmax.f32 %v291, 0.0
    %v316 = vmax.f32 %v294, 0.0
    %v317 = vld [vmem:[#allocation2] sm:$0xff]
    %v318 = vld [vmem:[#allocation2 + $0x8] sm:$0x3]
    %v319 = vadd.f32 %v297, %v298
    %v320 = vrot.slane %v319, 4
    %v321 = vadd.f32 %v319, %v320
    %v322 = vrot.slane %v321, 2
    %v323 = vadd.f32 %v321, %v322
    %v324 = vrot.slane %v323, 1
    %v325 = vadd.f32 %v323, %v324
    %v326 = vadd.f32 %v299, %v300
    %v327 = vrot.slane %v326, 4
    %v328 = vadd.f32 %v326, %v327
    %v329 = vrot.slane %v328, 2
    %v330 = vadd.f32 %v328, %v329
    %v331 = vrot.slane %v330, 1
    %v332 = vadd.f32 %v330, %v331
    %v333 = vadd.f32 %v301, %v302
    %v334 = vrot.slane %v333, 4
    %v335 = vadd.f32 %v333, %v334
    %v336 = vrot.slane %v335, 2
    %v337 = vadd.f32 %v335, %v336
    %v338 = vrot.slane %v337, 1
    %v339 = vadd.f32 %v337, %v338
    %v340 = vadd.f32 %v303, %v304
    %v341 = vrot.slane %v340, 4
    %v342 = vadd.f32 %v340, %v341
    %v343 = vrot.slane %v342, 2
    %v344 = vadd.f32 %v342, %v343
    %v345 = vrot.slane %v344, 1
    %v346 = vadd.f32 %v344, %v345
    %v347 = vadd.f32 %v305, %v306
    %v348 = vrot.slane %v347, 4
    %v349 = vadd.f32 %v347, %v348
    %v350 = vrot.slane %v349, 2
    %v351 = vadd.f32 %v349, %v350
    %v352 = vrot.slane %v351, 1
    %v353 = vadd.f32 %v351, %v352
    %v354 = vadd.f32 %v307, %v308
    %v355 = vrot.slane %v354, 4
    %v356 = vadd.f32 %v354, %v355
    %v357 = vrot.slane %v356, 2
    %v358 = vadd.f32 %v356, %v357
    %v359 = vrot.slane %v358, 1
    %v360 = vadd.f32 %v358, %v359
    %v361 = vadd.f32 %v309, %v310
    %v362 = vrot.slane %v361, 4
    %v363 = vadd.f32 %v361, %v362
    %v364 = vrot.slane %v363, 2
    %v365 = vadd.f32 %v363, %v364
    %v366 = vrot.slane %v365, 1
    %v367 = vadd.f32 %v365, %v366
    %v368 = vadd.f32 %v311, %v312
    %v369 = vrot.slane %v368, 4
    %v370 = vadd.f32 %v368, %v369
    %v371 = vrot.slane %v370, 2
    %v372 = vadd.f32 %v370, %v371
    %v373 = vrot.slane %v372, 1
    %v374 = vadd.f32 %v372, %v373
    %v375 = vadd.f32 %v313, %v314
    %v376 = vrot.slane %v375, 4
    %v377 = vadd.f32 %v375, %v376
    %v378 = vrot.slane %v377, 2
    %v379 = vadd.f32 %v377, %v378
    %v380 = vrot.slane %v379, 1
    %v381 = vadd.f32 %v379, %v380
    %v382 = vadd.f32 %v315, %v316
    %v383 = vrot.slane %v382, 4
    %v384 = vadd.f32 %v382, %v383
    %v385 = vrot.slane %v384, 2
    %v386 = vadd.f32 %v384, %v385
    %v387 = vrot.slane %v386, 1
    %v388 = vadd.f32 %v386, %v387
    %vm399 = vcmask 1041409
    %v400 = vsel %vm399, %v332, %v325
    %vm401 = vcmask 1042434
    %v402 = vsel %vm401, %v339, %v400
    %vm403 = vcmask 1043459
    %v404 = vsel %vm403, %v346, %v402
    %vm405 = vcmask 1044484
    %v406 = vsel %vm405, %v353, %v404
    %vm407 = vcmask 1045509
    %v408 = vsel %vm407, %v360, %v406
    %vm409 = vcmask 1046534
    %v410 = vsel %vm409, %v367, %v408
    %vm411 = vcmask 1047559
    %v412 = vsel %vm411, %v374, %v410
    %v413 = vsel %vm399, %v388, %v381
    %v416 = vadd.f32 %v317, %v412
    %v417 = vadd.f32 %v318, %v413
    %418 = vst [vmem:[#allocation2] sm:$0xff] %v416
    %419 = vst [vmem:[#allocation2 + $0x8] sm:$0x3] %v417
    %v420 = vld [vmem:[#allocation3] sm:$0xff]
    %v421 = vld [vmem:[#allocation3 + $0x8] sm:$0x3]
    %v422 = vmax.f32 %v297, %v298
    %v423 = vrot.slane %v422, 4
    %v424 = vmax.f32 %v422, %v423
    %v425 = vrot.slane %v424, 2
    %v426 = vmax.f32 %v424, %v425
    %v427 = vrot.slane %v426, 1
    %v428 = vmax.f32 %v426, %v427
    %v429 = vmax.f32 %v299, %v300
    %v430 = vrot.slane %v429, 4
    %v431 = vmax.f32 %v429, %v430
    %v432 = vrot.slane %v431, 2
    %v433 = vmax.f32 %v431, %v432
    %v434 = vrot.slane %v433, 1
    %v435 = vmax.f32 %v433, %v434
    %v436 = vmax.f32 %v301, %v302
    %v437 = vrot.slane %v436, 4
    %v438 = vmax.f32 %v436, %v437
    %v439 = vrot.slane %v438, 2
    %v440 = vmax.f32 %v438, %v439
    %v441 = vrot.slane %v440, 1
    %v442 = vmax.f32 %v440, %v441
    %v443 = vmax.f32 %v303, %v304
    %v444 = vrot.slane %v443, 4
    %v445 = vmax.f32 %v443, %v444
    %v446 = vrot.slane %v445, 2
    %v447 = vmax.f32 %v445, %v446
    %v448 = vrot.slane %v447, 1
    %v449 = vmax.f32 %v447, %v448
    %v450 = vmax.f32 %v305, %v306
    %v451 = vrot.slane %v450, 4
    %v452 = vmax.f32 %v450, %v451
    %v453 = vrot.slane %v452, 2
    %v454 = vmax.f32 %v452, %v453
    %v455 = vrot.slane %v454, 1
    %v456 = vmax.f32 %v454, %v455
    %v457 = vmax.f32 %v307, %v308
    %v458 = vrot.slane %v457, 4
    %v459 = vmax.f32 %v457, %v458
    %v460 = vrot.slane %v459, 2
    %v461 = vmax.f32 %v459, %v460
    %v462 = vrot.slane %v461, 1
    %v463 = vmax.f32 %v461, %v462
    %v464 = vmax.f32 %v309, %v310
    %v465 = vrot.slane %v464, 4
    %v466 = vmax.f32 %v464, %v465
    %v467 = vrot.slane %v466, 2
    %v468 = vmax.f32 %v466, %v467
    %v469 = vrot.slane %v468, 1
    %v470 = vmax.f32 %v468, %v469
    %v471 = vmax.f32 %v311, %v312
    %v472 = vrot.slane %v471, 4
    %v473 = vmax.f32 %v471, %v472
    %v474 = vrot.slane %v473, 2
    %v475 = vmax.f32 %v473, %v474
    %v476 = vrot.slane %v475, 1
    %v477 = vmax.f32 %v475, %v476
    %v478 = vmax.f32 %v313, %v314
    %v479 = vrot.slane %v478, 4
    %v480 = vmax.f32 %v478, %v479
    %v481 = vrot.slane %v480, 2
    %v482 = vmax.f32 %v480, %v481
    %v483 = vrot.slane %v482, 1
    %v484 = vmax.f32 %v482, %v483
    %v485 = vmax.f32 %v315, %v316
    %v486 = vrot.slane %v485, 4
    %v487 = vmax.f32 %v485, %v486
    %v488 = vrot.slane %v487, 2
    %v489 = vmax.f32 %v487, %v488
    %v490 = vrot.slane %v489, 1
    %v491 = vmax.f32 %v489, %v490
    %v502 = vsel %vm399, %v435, %v428
    %v503 = vsel %vm401, %v442, %v502
    %v504 = vsel %vm403, %v449, %v503
    %v505 = vsel %vm405, %v456, %v504
    %v506 = vsel %vm407, %v463, %v505
    %v507 = vsel %vm409, %v470, %v506
    %v508 = vsel %vm411, %v477, %v507
    %v509 = vsel %vm399, %v491, %v484
    %v512 = vmax.f32 %v420, %v508
    %v513 = vmax.f32 %v421, %v509
    %514 = vst [vmem:[#allocation3] sm:$0xff] %v512
    %515 = vst [vmem:[#allocation3 + $0x8] sm:$0x3] %v513
    // Predicated region
    $region26: #{tpu_custom_call.1} parent=1 // pred_check
      %p516 = pneg %p44
    $region27: #{tpu_custom_call.1} parent=1 // pred_check_branch
      %518 = sbr.rel (%p516) target = $region29
    $region28: #{tpu_custom_call.1} parent=1 // pred_region
      %v519 = vld [vmem:[#allocation3] sm:$0xff]
      %v520 = vld [vmem:[#allocation3 + $0x8] sm:$0x3]
      %521 = vst [vmem:[#allocation9] sm:$0xff] %v519
      %522 = vst [vmem:[#allocation9 + $0x10] sm:$0x3] %v520
      %v523 = vld [vmem:[#allocation2] sm:$0xff]
      %v524 = vld [vmem:[#allocation2 + $0x8] sm:$0x3]
      %v525 = vmul.f32 %v523, 0.0625
      %v526 = vmul.f32 %v524, 0.0625
      %527 = vst [vmem:[#allocation9 + $0x8] sm:$0xff] %v525
      %528 = vst [vmem:[#allocation9 + $0x18] sm:$0x3] %v526
    $region29: #{tpu_custom_call.1} parent=1 // pred_fallthru
      _
    // Predicated region
    $region30: #{tpu_custom_call.1} parent=1 // pred_check
      _
    $region31: #{tpu_custom_call.1} parent=1 // pred_check_branch
      %530 = sbr.rel (0) target = $region33
    $region32: #{tpu_custom_call.1} parent=1 // pred_region
      %s532 = ssub.s32 512, 512
      %533 = vsyncadd [#allocation6], %s532
      %s534 = sshll.u32 [#allocation9], 4
      %s535 = int_to_ptr.vmem [resolvable:$true] %s534
      %540 = dma.vmem_to_hbm [thread:$0]  %s535, 512, %s3, [#allocation6], 256, 256, 16
    $region33: #{tpu_custom_call.1} parent=1 // pred_fallthru
      _
    // Predicated region
    $region34: #{tpu_custom_call.1} parent=1 // pred_check
      _
    $region35: #{tpu_custom_call.1} parent=1 // pred_check_branch
      %542 = sbr.rel (0) target = $region37
    $region36: #{tpu_custom_call.1} parent=1 // pred_region
      %543 = dma.done [#allocation6], 512
    $region37: #{tpu_custom_call.1} parent=1 // pred_fallthru
      _
    %544 = vsyncpa [#allocation5], 1
    %545 = vsyncpa [#allocation8], 1
    %546 = vsyncpa [#allocation6], 1

</llo_original>
